<compile_context>
chip_gen: v7x
topology: tpu7x:2x2x1
jax: 0.10.0
libtpu: 0.0.40
codegen_flags: <defaults>
</compile_context>

<pallas_src>
import jax
import jax.numpy as jnp
from jax.experimental import pallas as pl
from jax.experimental.pallas import tpu as pltpu


def _round_up(n: int, m: int) -> int:
    return ((n + m - 1) // m) * m


def _mlp_kernel(x_ref, w1_ref, b1_ref, w2_ref, b2_ref, out_ref):
    # Layer 1: MXU matmul with f32 accumulation; bias + ReLU in f32 on the VPU.
    h = jnp.dot(x_ref[...], w1_ref[...], preferred_element_type=jnp.float32)
    h = jnp.maximum(h + b1_ref[...], 0.0)
    # Layer 2: cast the activation to the weight dtype only for the MXU operand
    # (no-op for f32; intentional bf16 down-cast when weights are bf16).
    y = jnp.dot(h.astype(w2_ref.dtype), w2_ref[...],
                preferred_element_type=jnp.float32)
    out_ref[...] = (y + b2_ref[...]).astype(out_ref.dtype)


def prepare_params(w1, b1, w2, b2, *, dtype=jnp.float32):
    """One-time parameter prep (call at load time, NOT per forward).

    w1: [obs_size, hidden], w2: [hidden, n_actions]  (transposed vs PyTorch).
    Hidden dim is zero-padded to a multiple of 128 so the intermediate
    activation is lane-dense; the tiny n_actions head stays unpadded (masked
    stores on 4 lanes beat a 32x write-amplified slab + re-slice). Biases stay
    f32 so bias/ReLU math is f32 even with bf16 weights.
    """
    obs_size, hidden = w1.shape
    n_actions = w2.shape[1]
    h_pad = _round_up(max(hidden, 128), 128)
    w1p = jnp.pad(w1.astype(dtype), ((0, 0), (0, h_pad - hidden)))
    b1p = jnp.pad(b1.astype(jnp.float32), ((0, h_pad - hidden),)).reshape(1, h_pad)
    w2p = jnp.pad(w2.astype(dtype), ((0, h_pad - hidden), (0, 0)))
    b2p = b2.astype(jnp.float32).reshape(1, n_actions)
    return w1p, b1p, w2p, b2p


def net_forward(x, params, *, batch_tile=1024):
    """x: [B, obs_size]; params = prepare_params(...)  ->  [B, n_actions]."""
    w1p, b1p, w2p, b2p = params
    B, obs_size = x.shape
    h_pad = w1p.shape[1]
    n_actions = w2p.shape[1]
    dtype = x.dtype

    # Sublane granularity: 8 for f32, 16 for bf16 (packed sublanes).
    sub = 16 if dtype == jnp.bfloat16 else 8

    # Batch tile: as large as reasonable (per-grid-step overhead ~0.35 us), but
    # for non-trivial batches keep >=2 grid steps so the parallel batch axis
    # can shard across both TensorCores on v7x (single-TC chips unaffected).
    tile_b = min(_round_up(batch_tile, sub), _round_up(B, sub))
    if B > 4 * sub:
        tile_b = min(tile_b, _round_up(pl.cdiv(B, 2), sub))
    nb = pl.cdiv(B, tile_b)

    out_shape = jax.ShapeDtypeStruct((B, n_actions), dtype)
    itemsize = jnp.dtype(dtype).itemsize
    cost = pl.CostEstimate(
        flops=2 * B * (obs_size * h_pad + h_pad * n_actions),
        transcendentals=0,
        bytes_accessed=(B * obs_size * itemsize
                        + B * n_actions * itemsize
                        + w1p.size * w1p.dtype.itemsize
                        + w2p.size * w2p.dtype.itemsize
                        + (b1p.size + b2p.size) * 4),
    )

    if nb == 1:
        # Small batch: no grid machinery — whole arrays as single VMEM blocks.
        vmem = pl.BlockSpec(memory_space=pltpu.MemorySpace.VMEM)
        return pl.pallas_call(
            _mlp_kernel,
            out_shape=out_shape,
            in_specs=[vmem] * 5,
            out_specs=vmem,
            cost_estimate=cost,
        )(x, w1p, b1p, w2p, b2p)

    # Batch-tiled grid. Ragged last block is handled by Pallas (masked output
    # stores), so no explicit batch padding or output slicing. Weights/biases
    # map to block (0, 0) every step, so they stay VMEM-resident.
    return pl.pallas_call(
        _mlp_kernel,
        out_shape=out_shape,
        grid=(nb,),
        in_specs=[
            pl.BlockSpec((tile_b, obs_size), lambda i: (i, 0)),
            pl.BlockSpec((obs_size, h_pad), lambda i: (0, 0)),
            pl.BlockSpec((1, h_pad), lambda i: (0, 0)),
            pl.BlockSpec((h_pad, n_actions), lambda i: (0, 0)),
            pl.BlockSpec((1, n_actions), lambda i: (0, 0)),
        ],
        out_specs=pl.BlockSpec((tile_b, n_actions), lambda i: (i, 0)),
        compiler_params=pltpu.CompilerParams(
            dimension_semantics=("parallel",),
        ),
        cost_estimate=cost,
    )(x, w1p, b1p, w2p, b2p)


def _ref_forward(x, w1, b1, w2, b2):
    return jnp.maximum(x @ w1 + b1, 0.0) @ w2 + b2


if __name__ == "__main__":
    # FrozenLake-style sizes: obs_size=16 (one-hot), hidden=32, 4 actions.
    obs_size = 16
    hidden_size = 32
    n_actions = 4

    key = jax.random.PRNGKey(0)
    kx, kw1, kb1, kw2, kb2, kx2 = jax.random.split(key, 6)

    lim1 = 1.0 / jnp.sqrt(obs_size)
    lim2 = 1.0 / jnp.sqrt(hidden_size)
    w1 = jax.random.uniform(kw1, (obs_size, hidden_size), jnp.float32, -lim1, lim1)
    b1 = jax.random.uniform(kb1, (hidden_size,), jnp.float32, -lim1, lim1)
    w2 = jax.random.uniform(kw2, (hidden_size, n_actions), jnp.float32, -lim2, lim2)
    b2 = jax.random.uniform(kb2, (n_actions,), jnp.float32, -lim2, lim2)

    # One-time parameter preparation (padding hoisted out of the forward pass).
    params = prepare_params(w1, b1, w2, b2)
    params = tuple(jax.block_until_ready(p) for p in params)

    # Small batch: exercises the grid-free single-block path.
    batch = 8
    x = jax.random.normal(kx, (batch, obs_size), dtype=jnp.float32)
    out = jax.block_until_ready(net_forward(x, params))
    ref = _ref_forward(x, w1, b1, w2, b2)
    assert out.shape == (batch, n_actions)
    assert jnp.allclose(out, ref, atol=1e-5, rtol=1e-5)

    # Larger ragged batch: exercises the batch-tiled parallel-grid path
    # (cdiv grid, masked last block, direct n_actions-wide output stores).
    batch2 = 300
    x2 = jax.random.normal(kx2, (batch2, obs_size), dtype=jnp.float32)
    out2 = jax.block_until_ready(net_forward(x2, params, batch_tile=128))
    ref2 = _ref_forward(x2, w1, b1, w2, b2)
    assert out2.shape == (batch2, n_actions)
    assert jnp.allclose(out2, ref2, atol=1e-5, rtol=1e-5)

    print("KERNEL_OK")
</pallas_src>

<mosaic_0001>
module attributes {stable_mosaic.version = 11 : i64} {
  func.func @_mlp_kernel(%arg0: memref<8x16xf32, #tpu.memory_space<vmem>>, %arg1: memref<16x128xf32, #tpu.memory_space<vmem>>, %arg2: memref<1x128xf32, #tpu.memory_space<vmem>>, %arg3: memref<128x4xf32, #tpu.memory_space<vmem>>, %arg4: memref<1x4xf32, #tpu.memory_space<vmem>>, %arg5: memref<8x4xf32, #tpu.memory_space<vmem>>) attributes {dimension_semantics = [], scalar_prefetch = 0 : i64, scratch_operands = 0 : i64, tpu.core_type = #tpu.core_type<tc>} {
    %c0 = arith.constant 0 : index
    %c0_0 = arith.constant 0 : index
    %0 = vector.load %arg0[%c0, %c0_0] : memref<8x16xf32, #tpu.memory_space<vmem>>, vector<8x16xf32>
    %c0_1 = arith.constant 0 : index
    %c0_2 = arith.constant 0 : index
    %1 = vector.load %arg1[%c0_1, %c0_2] : memref<16x128xf32, #tpu.memory_space<vmem>>, vector<16x128xf32>
    %cst = arith.constant dense<0.000000e+00> : vector<8x128xf32>
    %2 = tpu.matmul %0, %1, %cst {dimension_numbers = #tpu.dot_dimension_numbers<[1], [0], [0], [1], [0, 0, 1, 1], [], []>} : vector<8x16xf32>, vector<16x128xf32>, vector<8x128xf32> -> vector<8x128xf32>
    %c0_3 = arith.constant 0 : index
    %c0_4 = arith.constant 0 : index
    %3 = vector.load %arg2[%c0_3, %c0_4] : memref<1x128xf32, #tpu.memory_space<vmem>>, vector<1x128xf32>
    %4 = vector.broadcast %3 : vector<1x128xf32> to vector<8x128xf32>
    %5 = arith.addf %2, %4 : vector<8x128xf32>
    %cst_5 = arith.constant 0.000000e+00 : f32
    %6 = vector.broadcast %cst_5 : f32 to vector<8x128xf32>
    %7 = arith.maximumf %5, %6 : vector<8x128xf32>
    %c0_6 = arith.constant 0 : index
    %c0_7 = arith.constant 0 : index
    %8 = vector.load %arg3[%c0_6, %c0_7] : memref<128x4xf32, #tpu.memory_space<vmem>>, vector<128x4xf32>
    %cst_8 = arith.constant dense<0.000000e+00> : vector<8x4xf32>
    %9 = tpu.matmul %7, %8, %cst_8 {dimension_numbers = #tpu.dot_dimension_numbers<[1], [0], [0], [1], [0, 0, 1, 1], [], []>} : vector<8x128xf32>, vector<128x4xf32>, vector<8x4xf32> -> vector<8x4xf32>
    %c0_9 = arith.constant 0 : index
    %c0_10 = arith.constant 0 : index
    %10 = vector.load %arg4[%c0_9, %c0_10] : memref<1x4xf32, #tpu.memory_space<vmem>>, vector<1x4xf32>
    %11 = vector.broadcast %10 : vector<1x4xf32> to vector<8x4xf32>
    %12 = arith.addf %9, %11 : vector<8x4xf32>
    %c0_11 = arith.constant 0 : index
    %c0_12 = arith.constant 0 : index
    %13 = vector.load %arg5[%c0_11, %c0_12] : memref<8x4xf32, #tpu.memory_space<vmem>>, vector<8x4xf32>
    tpu.vector_store %arg5[%c0_11, %c0_12], %12 {strides = array<i32>} : memref<8x4xf32, #tpu.memory_space<vmem>>, vector<8x4xf32>,
    return
  }
}

</mosaic_0001>

<llo_original>
// kernel: tpu_custom_call.1
$region0: #{tpu_custom_call.1}
  #allocation0 [shape = 'u32[]', space=smem, size = 0x4, offset = 0x4, fixed_abs, tag = 'smem constant byte address 0x4 - core index']
  #allocation1 [shape = 'u32[144,128]{1,0:T(1,128)}', space=vmem, size = 0x12000, scoped, tag = 'internal scratch']
  %s0 = inlined_call_operand.vmem [shape: f32[8,16], index: 0, kind: input, shape index: {}]
  %s1 = inlined_call_operand.vmem [shape: f32[16,128], index: 1, kind: input, shape index: {}]
  %s2 = inlined_call_operand.vmem [shape: f32[1,128], index: 2, kind: input, shape index: {}]
  %s3 = inlined_call_operand.vmem [shape: f32[128,4], index: 3, kind: input, shape index: {}]
  %s4 = inlined_call_operand.vmem [shape: f32[1,4], index: 4, kind: input, shape index: {}]
  %s5 = inlined_call_operand.vmem [shape: f32[8,4], index: 5, kind: output, shape index: {}]
  %s6 = sld [smem:[#allocation0]]
  $region30: #{tpu_custom_call.1} parent=0
    _
  %s8 = ssub.s32 1, %s6
  %s9 = scalar_select 0, %s8, %s6
  // Predicated region
  $region2: #{tpu_custom_call.1} parent=0 // pred_check
    _
  $region3: #{tpu_custom_call.1} parent=0 // pred_check_branch
    %11 = sbr.rel (0) target = $region5
  $region4: #{tpu_custom_call.1} parent=0 // pred_region
    _
  $region5: #{tpu_custom_call.1} parent=0 // pred_fallthru
    _
  // Predicated region
  $region6: #{tpu_custom_call.1} parent=0 // pred_check
    _
  $region7: #{tpu_custom_call.1} parent=0 // pred_check_branch
    %13 = sbr.rel (0) target = $region9
  $region8: #{tpu_custom_call.1} parent=0 // pred_region
    _
  $region9: #{tpu_custom_call.1} parent=0 // pred_fallthru
    _
  // Predicated region
  $region10: #{tpu_custom_call.1} parent=0 // pred_check
    _
  $region11: #{tpu_custom_call.1} parent=0 // pred_check_branch
    %15 = sbr.rel (0) target = $region13
  $region12: #{tpu_custom_call.1} parent=0 // pred_region
    _
  $region13: #{tpu_custom_call.1} parent=0 // pred_fallthru
    _
  // Predicated region
  $region14: #{tpu_custom_call.1} parent=0 // pred_check
    _
  $region15: #{tpu_custom_call.1} parent=0 // pred_check_branch
    %17 = sbr.rel (0) target = $region17
  $region16: #{tpu_custom_call.1} parent=0 // pred_region
    _
  $region17: #{tpu_custom_call.1} parent=0 // pred_fallthru
    _
  // Predicated region
  $region18: #{tpu_custom_call.1} parent=0 // pred_check
    _
  $region19: #{tpu_custom_call.1} parent=0 // pred_check_branch
    %19 = sbr.rel (0) target = $region21
  $region20: #{tpu_custom_call.1} parent=0 // pred_region
    _
  $region21: #{tpu_custom_call.1} parent=0 // pred_fallthru
    _
  %v20 = vld [vmem:[%s0] sm:$0xff]
  %v21 = vld [vmem:[%s1] sm:$0xff]
  %v22 = vld [vmem:[%s1 + $0x8] sm:$0xff]
  %v23 = vld [vmem:[%s2] sm:$0x1]
  %v25 = vlaneseq
  %v26 = vshrl.u32 %v25, 7
  %v27 = vsub.s32 0, %v26
  %v28 = vrot.slane %v23, %v27
  %vm30 = vcmask 130048
  %v32 = vsel %vm30, %v20, 0
  %34 = vmatprep.subr.mxu0 0.0
  %35 = vmatpush1.msra.mxu0 %v21
  %36 = vmatprep.subr.mxu0 0.0
  %37 = vmatpush1.msra.mxu0 %v22
  %38 = vmatprep.subr.mxu0 0.0
  %39 = vmatpush1.msra.mxu0 0.0
  %40 = vmatprep.subr.mxu0 0.0
  %41 = vmatpush1.msra.mxu0 0.0
  %42 = vmatprep.subr.mxu0 0.0
  %43 = vmatpush1.msra.mxu0 0.0
  %44 = vmatprep.subr.mxu0 0.0
  %45 = vmatpush1.msra.mxu0 0.0
  %46 = vmatprep.subr.mxu0 0.0
  %47 = vmatpush1.msra.mxu0 0.0
  %48 = vmatprep.subr.mxu0 0.0
  %49 = vmatpush1.msra.mxu0 0.0
  %50 = vmatprep.subr.mxu0 0.0
  %51 = vmatpush1.msra.mxu0 0.0
  %52 = vmatprep.subr.mxu0 0.0
  %53 = vmatpush1.msra.mxu0 0.0
  %54 = vmatprep.subr.mxu0 0.0
  %55 = vmatpush1.msra.mxu0 0.0
  %56 = vmatprep.subr.mxu0 0.0
  %57 = vmatpush1.msra.mxu0 0.0
  %58 = vmatprep.subr.mxu0 0.0
  %59 = vmatpush1.msra.mxu0 0.0
  %60 = vmatprep.subr.mxu0 0.0
  %61 = vmatpush1.msra.mxu0 0.0
  %62 = vmatprep.subr.mxu0 0.0
  %63 = vmatpush1.msra.mxu0 0.0
  %64 = vmatprep.subr.mxu0 0.0
  %65 = vmatpush1.msra.mxu0 0.0
  %66 = vmatprep.subr.mxu0 0.0
  %67 = vmatpush1.msra.mxu0 0.0
  %68 = vmatprep.subr.mxu0 0.0
  %69 = vmatpush1.msra.mxu0 0.0
  %70 = vmatprep.subr.mxu0 0.0
  %71 = vmatpush1.msra.mxu0 0.0
  %72 = vmatprep.subr.mxu0 0.0
  %73 = vmatpush1.msra.mxu0 0.0
  %74 = vmatprep.subr.mxu0 0.0
  %75 = vmatpush1.msra.mxu0 0.0
  %76 = vmatprep.subr.mxu0 0.0
  %77 = vmatpush1.msra.mxu0 0.0
  %78 = vmatprep.subr.mxu0 0.0
  %79 = vmatpush1.msra.mxu0 0.0
  %80 = vmatprep.subr.mxu0 0.0
  %81 = vmatpush1.msra.mxu0 0.0
  %82 = vmatprep.subr.mxu0 0.0
  %83 = vmatpush1.msra.mxu0 0.0
  %84 = vmatprep.subr.mxu0 0.0
  %85 = vmatpush1.msra.mxu0 0.0
  %86 = vmatprep.subr.mxu0 0.0
  %87 = vmatpush1.msra.mxu0 0.0
  %88 = vmatprep.subr.mxu0 0.0
  %89 = vmatpush1.msra.mxu0 0.0
  %90 = vmatprep.subr.mxu0 0.0
  %91 = vmatpush1.msra.mxu0 0.0
  %92 = vmatprep.subr.mxu0 0.0
  %93 = vmatpush1.msra.mxu0 0.0
  %94 = vmatprep.subr.mxu0 0.0
  %95 = vmatpush1.msra.mxu0 0.0
  %96 = vmatprep.subr.mxu0 0.0
  %97 = vmatpush1.msra.mxu0 0.0
  %98 = vmatprep.mubr.f32.mxu0 0.0
  %99 = vmatmul.mubr.f32.gmra.mrb[0].mxu0 %v32
  %v100 = vpop.f32.mrb[0].mxu0
  %v101 = vadd.f32 %v28, %v100
  %v102 = vpop.f32.mrb[0].mxu0
  %103 = vdwg.mxu0
  %v104 = vmax.f32 %v101, 0.0
  %v105 = vld [vmem:[%s3] sm:$0xff]
  %v106 = vld [vmem:[%s3 + $0x8] sm:$0xff]
  %v107 = vld [vmem:[%s3 + $0x10] sm:$0xff]
  %v108 = vld [vmem:[%s3 + $0x18] sm:$0xff]
  %v109 = vld [vmem:[%s3 + $0x20] sm:$0xff]
  %v110 = vld [vmem:[%s3 + $0x28] sm:$0xff]
  %v111 = vld [vmem:[%s3 + $0x30] sm:$0xff]
  %v112 = vld [vmem:[%s3 + $0x38] sm:$0xff]
  %v113 = vld [vmem:[%s3 + $0x40] sm:$0xff]
  %v114 = vld [vmem:[%s3 + $0x48] sm:$0xff]
  %v115 = vld [vmem:[%s3 + $0x50] sm:$0xff]
  %v116 = vld [vmem:[%s3 + $0x58] sm:$0xff]
  %v117 = vld [vmem:[%s3 + $0x60] sm:$0xff]
  %v118 = vld [vmem:[%s3 + $0x68] sm:$0xff]
  %v119 = vld [vmem:[%s3 + $0x70] sm:$0xff]
  %v120 = vld [vmem:[%s3 + $0x78] sm:$0xff]
  %v121 = vld [vmem:[%s4] sm:$0x1]
  %v123 = vlaneseq
  %v124 = vshrl.u32 %v123, 7
  %v125 = vsub.s32 0, %v124
  %v126 = vrot.slane %v121, %v125
  %128 = vmatprep.subr.mxu0 0.0
  %129 = vmatpush1.msra.mxu0 %v105
  %130 = vmatprep.subr.mxu0 0.0
  %131 = vmatpush1.msra.mxu0 %v106
  %132 = vmatprep.subr.mxu0 0.0
  %133 = vmatpush1.msra.mxu0 %v107
  %134 = vmatprep.subr.mxu0 0.0
  %135 = vmatpush1.msra.mxu0 %v108
  %136 = vmatprep.subr.mxu0 0.0
  %137 = vmatpush1.msra.mxu0 %v109
  %138 = vmatprep.subr.mxu0 0.0
  %139 = vmatpush1.msra.mxu0 %v110
  %140 = vmatprep.subr.mxu0 0.0
  %141 = vmatpush1.msra.mxu0 %v111
  %142 = vmatprep.subr.mxu0 0.0
  %143 = vmatpush1.msra.mxu0 %v112
  %144 = vmatprep.subr.mxu0 0.0
  %145 = vmatpush1.msra.mxu0 %v113
  %146 = vmatprep.subr.mxu0 0.0
  %147 = vmatpush1.msra.mxu0 %v114
  %148 = vmatprep.subr.mxu0 0.0
  %149 = vmatpush1.msra.mxu0 %v115
  %150 = vmatprep.subr.mxu0 0.0
  %151 = vmatpush1.msra.mxu0 %v116
  %152 = vmatprep.subr.mxu0 0.0
  %153 = vmatpush1.msra.mxu0 %v117
  %154 = vmatprep.subr.mxu0 0.0
  %155 = vmatpush1.msra.mxu0 %v118
  %156 = vmatprep.subr.mxu0 0.0
  %157 = vmatpush1.msra.mxu0 %v119
  %158 = vmatprep.subr.mxu0 0.0
  %159 = vmatpush1.msra.mxu0 %v120
  %160 = vmatprep.subr.mxu0 0.0
  %161 = vmatpush1.msra.mxu0 0.0
  %162 = vmatprep.subr.mxu0 0.0
  %163 = vmatpush1.msra.mxu0 0.0
  %164 = vmatprep.subr.mxu0 0.0
  %165 = vmatpush1.msra.mxu0 0.0
  %166 = vmatprep.subr.mxu0 0.0
  %167 = vmatpush1.msra.mxu0 0.0
  %168 = vmatprep.subr.mxu0 0.0
  %169 = vmatpush1.msra.mxu0 0.0
  %170 = vmatprep.subr.mxu0 0.0
  %171 = vmatpush1.msra.mxu0 0.0
  %172 = vmatprep.subr.mxu0 0.0
  %173 = vmatpush1.msra.mxu0 0.0
  %174 = vmatprep.subr.mxu0 0.0
  %175 = vmatpush1.msra.mxu0 0.0
  %176 = vmatprep.subr.mxu0 0.0
  %177 = vmatpush1.msra.mxu0 0.0
  %178 = vmatprep.subr.mxu0 0.0
  %179 = vmatpush1.msra.mxu0 0.0
  %180 = vmatprep.subr.mxu0 0.0
  %181 = vmatpush1.msra.mxu0 0.0
  %182 = vmatprep.subr.mxu0 0.0
  %183 = vmatpush1.msra.mxu0 0.0
  %184 = vmatprep.subr.mxu0 0.0
  %185 = vmatpush1.msra.mxu0 0.0
  %186 = vmatprep.subr.mxu0 0.0
  %187 = vmatpush1.msra.mxu0 0.0
  %188 = vmatprep.subr.mxu0 0.0
  %189 = vmatpush1.msra.mxu0 0.0
  %190 = vmatprep.subr.mxu0 0.0
  %191 = vmatpush1.msra.mxu0 0.0
  %192 = vmatprep.mubr.f32.mxu0 0.0
  %193 = vmatmul.mubr.f32.gmra.mrb[0].mxu0 %v104
  %v194 = vpop.f32.mrb[0].mxu0
  %v195 = vadd.f32 %v126, %v194
  %v196 = vpop.f32.mrb[0].mxu0
  %197 = vdwg.mxu0
  %vm198 = vcmask 31744
  %199 = vst.msk [vmem:[%s5] sm:$0xff] %vm198, %v195
  // Predicated region
  $region22: #{tpu_custom_call.1} parent=0 // pred_check
    _
  $region23: #{tpu_custom_call.1} parent=0 // pred_check_branch
    %201 = sbr.rel (0) target = $region25
  $region24: #{tpu_custom_call.1} parent=0 // pred_region
    _
  $region25: #{tpu_custom_call.1} parent=0 // pred_fallthru
    _
  // Predicated region
  $region26: #{tpu_custom_call.1} parent=0 // pred_check
    _
  $region27: #{tpu_custom_call.1} parent=0 // pred_check_branch
    %203 = sbr.rel (0) target = $region29
  $region28: #{tpu_custom_call.1} parent=0 // pred_region
    _
  $region29: #{tpu_custom_call.1} parent=0 // pred_fallthru
    _

</llo_original>
